<compile_context>
chip_gen: v7x
topology: tpu7x:2x2x1
jax: 0.10.0
libtpu: 0.0.40
codegen_flags: <defaults>
</compile_context>

<pallas_src>
import jax
import jax.numpy as jnp
from jax import lax
from jax.experimental import pallas as pl
from jax.experimental.pallas import tpu as pltpu


def span_head_kernel(x_ref, w1t_ref, b1_ref, w2t_ref, b2_ref, o_ref):
    """Fused, lane-dense: o = W2^T tanh(W1^T x^T + b1) + b2 for one row tile."""
    x = x_ref[...].astype(jnp.float32)                 # (tm, H); upcast if streamed bf16
    # h = W1^T @ x^T -> (D, tm); contraction over H (last dim of both operands).
    h = lax.dot_general(
        w1t_ref[...], x,                               # (D, H) , (tm, H)
        dimension_numbers=(((1,), (1,)), ((), ())),
        preferred_element_type=jnp.float32,
    )                                                  # (D, tm)
    h = jnp.tanh(h + b1_ref[...])                      # bias (D, 1) broadcasts over lanes
    # y = W2^T @ h -> (L, tm); lane-dense output (rows on the lane axis).
    y = jnp.dot(w2t_ref[...], h, preferred_element_type=jnp.float32)
    o_ref[...] = (y + b2_ref[...]).astype(o_ref.dtype)


def _pick_tile(M, tm_max):
    """Row tile: multiple of 128, as large as possible up to tm_max, while
    keeping >= 2 grid steps when M allows (so v7x's two TCs both get work)."""
    tm_max = max(128, (tm_max // 128) * 128)
    if M <= 2 * 128:
        return 128
    half = -(-M // 2)                      # ceil(M / 2)
    half = ((half + 127) // 128) * 128     # round up to lane width
    return min(tm_max, half)


def span_prediction_head(features, w1, b1, w2, b2, *, tm=8192, stream_dtype=None):
    """features: (B, S, H) -> logits: (B, S, num_labels). Inference only."""
    B, S, H = features.shape
    D = w1.shape[1]
    L = w2.shape[1]                        # num_labels (== 2 for this head)
    M = B * S

    tm = _pick_tile(M, tm)
    num_tiles = pl.cdiv(M, tm)

    # Flatten only — no full-array jnp.pad; Pallas masks the ragged tail block.
    x2d = features.reshape(M, H)
    if stream_dtype is not None:
        x2d = x2d.astype(stream_dtype)     # e.g. bf16: halves HBM read traffic

    # Tiny weights, pre-transposed for the lane-dense orientation.
    w1t = w1.T.astype(jnp.float32)         # (D, H)
    w2t = w2.T.astype(jnp.float32)         # (L, D)
    b1c = b1.reshape(D, 1).astype(jnp.float32)
    b2c = b2.reshape(L, 1).astype(jnp.float32)

    # VMEM budget: the (tm, H) block fills only H of 128 lanes -> lane-padded
    # footprint is tm*128*itemsize per buffer; the (L, tm) output pads to 8
    # sublanes.  Double-buffered, plus headroom for the resident weights and
    # compiler scratch.
    x_bytes = tm * 128 * x2d.dtype.itemsize
    o_bytes = 8 * tm * features.dtype.itemsize
    vmem_limit = 2 * (x_bytes + o_bytes) + (4 << 20)
    vmem_limit = int(min(max(vmem_limit, 16 << 20), 48 << 20))

    cost = pl.CostEstimate(
        flops=2 * M * (H * D + D * L),
        transcendentals=M * D,
        bytes_accessed=int(M * H * x2d.dtype.itemsize
                           + M * L * features.dtype.itemsize
                           + (H * D + D + D * L + L) * 4),
    )

    out_t = pl.pallas_call(
        span_head_kernel,
        out_shape=jax.ShapeDtypeStruct((L, M), features.dtype),
        grid=(num_tiles,),
        in_specs=[
            pl.BlockSpec((tm, H), lambda i: (i, 0)),    # x row tile (streamed)
            pl.BlockSpec((D, H), lambda i: (0, 0)),     # W1^T (grid-invariant)
            pl.BlockSpec((D, 1), lambda i: (0, 0)),     # b1
            pl.BlockSpec((L, D), lambda i: (0, 0)),     # W2^T
            pl.BlockSpec((L, 1), lambda i: (0, 0)),     # b2
        ],
        out_specs=pl.BlockSpec((L, tm), lambda i: (0, i)),  # lane-dense output
        compiler_params=pltpu.CompilerParams(
            dimension_semantics=("parallel",),
            vmem_limit_bytes=vmem_limit,
        ),
        cost_estimate=cost,
    )(x2d, w1t, b1c, w2t, b2c)

    # (L, M) -> (M, L) -> (B, S, L); the transpose is tiny (L = 2 rows).
    return out_t.T.reshape(B, S, L)


if __name__ == "__main__":
    # Config implied by the module:
    #   hidden_size=32, span_head_inner_dim=16, num_labels=2
    batch, seq, hidden, inner, num_labels = 2, 8, 32, 16, 2

    key = jax.random.PRNGKey(0)
    k_feat, k_w1, k_b1, k_w2, k_b2 = jax.random.split(key, 5)

    features = jax.random.normal(k_feat, (batch, seq, hidden), dtype=jnp.float32)
    # Deterministic synthetic parameters (Linear weights stored as (in, out)).
    w1 = jax.random.normal(k_w1, (hidden, inner), dtype=jnp.float32) * 0.05
    b1 = jax.random.normal(k_b1, (inner,), dtype=jnp.float32) * 0.01
    w2 = jax.random.normal(k_w2, (inner, num_labels), dtype=jnp.float32) * 0.05
    b2 = jax.random.normal(k_b2, (num_labels,), dtype=jnp.float32) * 0.01

    out = span_prediction_head(features, w1, b1, w2, b2)
    out = jax.block_until_ready(out)

    # Pure-JAX reference check of the same math.
    ref = jnp.tanh(features.reshape(-1, hidden) @ w1 + b1) @ w2 + b2
    ref = ref.reshape(batch, seq, num_labels)
    assert out.shape == (batch, seq, num_labels)
    assert jnp.allclose(out, ref, atol=1e-5, rtol=1e-5)

    print("KERNEL_OK")
</pallas_src>

<mosaic_0001>
module attributes {stable_mosaic.version = 11 : i64} {
  func.func @span_head_kernel(%arg0: i32, %arg1: memref<128x32xf32, #tpu.memory_space<vmem>>, %arg2: memref<16x32xf32, #tpu.memory_space<vmem>>, %arg3: memref<16x1xf32, #tpu.memory_space<vmem>>, %arg4: memref<2x16xf32, #tpu.memory_space<vmem>>, %arg5: memref<2x1xf32, #tpu.memory_space<vmem>>, %arg6: memref<2x128xf32, #tpu.memory_space<vmem>>) attributes {dimension_semantics = [#tpu.dimension_semantics<parallel>], iteration_bounds = array<i64: 1>, scalar_prefetch = 0 : i64, scratch_operands = 0 : i64, tpu.core_type = #tpu.core_type<tc>, window_params = [{transform_indices = @transform_0, window_bounds = array<i64: 128, 32>}, {pipeline_mode = #tpu.pipeline_mode<synchronous>, transform_indices = @transform_1, window_bounds = array<i64: 16, 32>}, {pipeline_mode = #tpu.pipeline_mode<synchronous>, transform_indices = @transform_2, window_bounds = array<i64: 16, 1>}, {pipeline_mode = #tpu.pipeline_mode<synchronous>, transform_indices = @transform_3, window_bounds = array<i64: 2, 16>}, {pipeline_mode = #tpu.pipeline_mode<synchronous>, transform_indices = @transform_4, window_bounds = array<i64: 2, 1>}, {transform_indices = @transform_5, window_bounds = array<i64: 2, 128>}]} {
    %c0 = arith.constant 0 : index
    %c0_0 = arith.constant 0 : index
    %0 = vector.load %arg1[%c0, %c0_0] : memref<128x32xf32, #tpu.memory_space<vmem>>, vector<128x32xf32>
    %c0_1 = arith.constant 0 : index
    %c0_2 = arith.constant 0 : index
    %1 = vector.load %arg2[%c0_1, %c0_2] : memref<16x32xf32, #tpu.memory_space<vmem>>, vector<16x32xf32>
    %cst = arith.constant dense<0.000000e+00> : vector<16x128xf32>
    %2 = tpu.matmul %1, %0, %cst {dimension_numbers = #tpu.dot_dimension_numbers<[1], [1], [0], [0], [0, 0, 1, 0], [], []>} : vector<16x32xf32>, vector<128x32xf32>, vector<16x128xf32> -> vector<16x128xf32>
    %c0_3 = arith.constant 0 : index
    %c0_4 = arith.constant 0 : index
    %3 = vector.load %arg3[%c0_3, %c0_4] : memref<16x1xf32, #tpu.memory_space<vmem>>, vector<16x1xf32>
    %4 = vector.broadcast %3 : vector<16x1xf32> to vector<16x128xf32>
    %5 = arith.addf %2, %4 : vector<16x128xf32>
    %6 = math.tanh %5 : vector<16x128xf32>
    %c0_5 = arith.constant 0 : index
    %c0_6 = arith.constant 0 : index
    %7 = vector.load %arg4[%c0_5, %c0_6] : memref<2x16xf32, #tpu.memory_space<vmem>>, vector<2x16xf32>
    %cst_7 = arith.constant dense<0.000000e+00> : vector<2x128xf32>
    %8 = tpu.matmul %7, %6, %cst_7 {dimension_numbers = #tpu.dot_dimension_numbers<[1], [0], [0], [1], [0, 0, 1, 1], [], []>} : vector<2x16xf32>, vector<16x128xf32>, vector<2x128xf32> -> vector<2x128xf32>
    %c0_8 = arith.constant 0 : index
    %c0_9 = arith.constant 0 : index
    %9 = vector.load %arg5[%c0_8, %c0_9] : memref<2x1xf32, #tpu.memory_space<vmem>>, vector<2x1xf32>
    %10 = vector.broadcast %9 : vector<2x1xf32> to vector<2x128xf32>
    %11 = arith.addf %8, %10 : vector<2x128xf32>
    %c0_10 = arith.constant 0 : index
    %c0_11 = arith.constant 0 : index
    %12 = vector.load %arg6[%c0_10, %c0_11] : memref<2x128xf32, #tpu.memory_space<vmem>>, vector<2x128xf32>
    tpu.vector_store %arg6[%c0_10, %c0_11], %11 {strides = array<i32>} : memref<2x128xf32, #tpu.memory_space<vmem>>, vector<2x128xf32>,
    return
  }
  func.func @transform_0(%arg0: i32) -> (i32, i32) {
    %c0_i32 = arith.constant 0 : i32
    %c0_i32_0 = arith.constant 0 : i32
    return %arg0, %c0_i32 : i32, i32
  }
  func.func @transform_1(%arg0: i32) -> (i32, i32) {
    %c0_i32 = arith.constant 0 : i32
    %c0_i32_0 = arith.constant 0 : i32
    %c0_i32_1 = arith.constant 0 : i32
    return %c0_i32, %c0_i32_0 : i32, i32
  }
  func.func @transform_2(%arg0: i32) -> (i32, i32) {
    %c0_i32 = arith.constant 0 : i32
    %c0_i32_0 = arith.constant 0 : i32
    %c0_i32_1 = arith.constant 0 : i32
    return %c0_i32, %c0_i32_0 : i32, i32
  }
  func.func @transform_3(%arg0: i32) -> (i32, i32) {
    %c0_i32 = arith.constant 0 : i32
    %c0_i32_0 = arith.constant 0 : i32
    %c0_i32_1 = arith.constant 0 : i32
    return %c0_i32, %c0_i32_0 : i32, i32
  }
  func.func @transform_4(%arg0: i32) -> (i32, i32) {
    %c0_i32 = arith.constant 0 : i32
    %c0_i32_0 = arith.constant 0 : i32
    %c0_i32_1 = arith.constant 0 : i32
    return %c0_i32, %c0_i32_0 : i32, i32
  }
  func.func @transform_5(%arg0: i32) -> (i32, i32) {
    %c0_i32 = arith.constant 0 : i32
    %c0_i32_0 = arith.constant 0 : i32
    return %c0_i32, %arg0 : i32, i32
  }
}

</mosaic_0001>

<llo_original>
// kernel: tpu_custom_call.1
$region0: #{tpu_custom_call.1}
  #allocation0 [shape = 'u32[]', space=smem, size = 0x4, offset = 0x4, fixed_abs, tag = 'smem constant byte address 0x4 - core index']
  #allocation1 [shape = 'u32[144,128]{1,0:T(1,128)}', space=vmem, size = 0x12000, scoped, tag = 'internal scratch']
  %s0 = inlined_call_operand.vmem [shape: f32[16,32], index: 0, kind: input, shape index: {}]
  %s1 = inlined_call_operand.hbm [shape: f32[16,32], index: 1, kind: input, shape index: {}]
  %s2 = inlined_call_operand.vmem [shape: f32[16,1], index: 2, kind: input, shape index: {}]
  %s3 = inlined_call_operand.vmem [shape: f32[2,16], index: 3, kind: input, shape index: {}]
  %s4 = inlined_call_operand.vmem [shape: f32[2,1], index: 4, kind: input, shape index: {}]
  %s5 = inlined_call_operand.hbm [shape: f32[2,16], index: 5, kind: output, shape index: {}]
  %s6 = sld [smem:[#allocation0]]
  $region34: #{tpu_custom_call.1} parent=0
    _
  %s8 = ssub.s32 1, %s6
  %s9 = scalar_select 0, %s8, %s6
  $region1: #{tpu_custom_call.1} parent=0
    #allocation2 [shape = 'u8[8192]{0}', space=vmem, size = 0x2000, scoped, tag = 'input window, operand 1, single buffered']
    #allocation3 [shape = 's32[1]{0}', space=sflag, size = 0x4, scoped, tag = 'scoped memory for tpu_custom_call.1']
    #allocation4 [shape = 's32[1]{0}', space=sflag, size = 0x4, scoped, tag = 'scoped memory for tpu_custom_call.1']
    #allocation5 [shape = 'u8[1024]{0}', space=vmem, size = 0x400, scoped, tag = 'output window, operand 0, single buffered']
    %10 = vsyncpa [#allocation3], 0
    %11 = vsyncpa [#allocation4], 0
    // Predicated region
    $region2: #{tpu_custom_call.1} parent=1 // pred_check
      _
    $region3: #{tpu_custom_call.1} parent=1 // pred_check_branch
      %13 = sbr.rel (0) target = $region5
    $region4: #{tpu_custom_call.1} parent=1 // pred_region
      _
    $region5: #{tpu_custom_call.1} parent=1 // pred_fallthru
      _
    // Predicated region
    $region6: #{tpu_custom_call.1} parent=1 // pred_check
      _
    $region7: #{tpu_custom_call.1} parent=1 // pred_check_branch
      %15 = sbr.rel (0) target = $region9
    $region8: #{tpu_custom_call.1} parent=1 // pred_region
      %s17 = ssub.s32 256, 256
      %18 = vsyncadd [#allocation3], %s17
      %s19 = sshll.u32 [#allocation2], 4
      %s20 = int_to_ptr.vmem [resolvable:$true] %s19
      %25 = dma.hbm_to_vmem [thread:$0]  %s1, 256, %s20, [#allocation3], 128, 128, 8
    $region9: #{tpu_custom_call.1} parent=1 // pred_fallthru
      _
    // Predicated region
    $region10: #{tpu_custom_call.1} parent=1 // pred_check
      _
    $region11: #{tpu_custom_call.1} parent=1 // pred_check_branch
      %27 = sbr.rel (0) target = $region13
    $region12: #{tpu_custom_call.1} parent=1 // pred_region
      _
    $region13: #{tpu_custom_call.1} parent=1 // pred_fallthru
      _
    // Predicated region
    $region14: #{tpu_custom_call.1} parent=1 // pred_check
      _
    $region15: #{tpu_custom_call.1} parent=1 // pred_check_branch
      %29 = sbr.rel (0) target = $region17
    $region16: #{tpu_custom_call.1} parent=1 // pred_region
      _
    $region17: #{tpu_custom_call.1} parent=1 // pred_fallthru
      _
    // Predicated region
    $region18: #{tpu_custom_call.1} parent=1 // pred_check
      _
    $region19: #{tpu_custom_call.1} parent=1 // pred_check_branch
      %31 = sbr.rel (0) target = $region21
    $region20: #{tpu_custom_call.1} parent=1 // pred_region
      _
    $region21: #{tpu_custom_call.1} parent=1 // pred_fallthru
      _
    // Predicated region
    $region22: #{tpu_custom_call.1} parent=1 // pred_check
      _
    $region23: #{tpu_custom_call.1} parent=1 // pred_check_branch
      %33 = sbr.rel (0) target = $region25
    $region24: #{tpu_custom_call.1} parent=1 // pred_region
      %34 = dma.done [#allocation3], 256
    $region25: #{tpu_custom_call.1} parent=1 // pred_fallthru
      _
    %v35 = vld [vmem:[%s0] sm:$0xff]
    %v36 = vld [vmem:[%s0 + $0x8] sm:$0xff]
    %v37 = vld [vmem:[%s0 + $0x10] sm:$0xff]
    %v38 = vld [vmem:[%s0 + $0x18] sm:$0xff]
    %v39 = vld [vmem:[%s0 + $0x20] sm:$0xff]
    %v40 = vld [vmem:[%s0 + $0x28] sm:$0xff]
    %v41 = vld [vmem:[%s0 + $0x30] sm:$0xff]
    %v42 = vld [vmem:[%s0 + $0x38] sm:$0xff]
    %v43 = vld [vmem:[%s0 + $0x40] sm:$0xff]
    %v44 = vld [vmem:[%s0 + $0x48] sm:$0xff]
    %v45 = vld [vmem:[%s0 + $0x50] sm:$0xff]
    %v46 = vld [vmem:[%s0 + $0x58] sm:$0xff]
    %v47 = vld [vmem:[%s0 + $0x60] sm:$0xff]
    %v48 = vld [vmem:[%s0 + $0x68] sm:$0xff]
    %v49 = vld [vmem:[%s0 + $0x70] sm:$0xff]
    %v50 = vld [vmem:[%s0 + $0x78] sm:$0xff]
    %v51 = vld [vmem:[#allocation2] sm:$0xff]
    %v52 = vld [vmem:[#allocation2 + $0x8] sm:$0xff]
    %v53 = vld [vmem:[%s2] sm:$0xff]
    %v54 = vld [vmem:[%s2 + $0x8] sm:$0xff]
    %56 = vset.pattern.permute.xlu0 0
    %57 = vperm.xlu0 %56, %v53
    %v58 = vpop.permute.xlu0 %57
    %61 = vset.pattern.permute.xlu0 0
    %62 = vperm.xlu0 %61, %v54
    %v63 = vpop.permute.xlu0 %62
    %vm65 = vcmask 261120
    %v67 = vsel %vm65, %v51, 0
    %v70 = vsel %vm65, %v52, 0
    %v73 = vsel %vm65, %v35, 0
    %v76 = vsel %vm65, %v36, 0
    %v79 = vsel %vm65, %v37, 0
    %v82 = vsel %vm65, %v38, 0
    %v85 = vsel %vm65, %v39, 0
    %v88 = vsel %vm65, %v40, 0
    %v91 = vsel %vm65, %v41, 0
    %v94 = vsel %vm65, %v42, 0
    %v97 = vsel %vm65, %v43, 0
    %v100 = vsel %vm65, %v44, 0
    %v103 = vsel %vm65, %v45, 0
    %v106 = vsel %vm65, %v46, 0
    %v109 = vsel %vm65, %v47, 0
    %v112 = vsel %vm65, %v48, 0
    %v115 = vsel %vm65, %v49, 0
    %v118 = vsel %vm65, %v50, 0
    %120 = vmatprep.subr.mxu0 0.0
    %121 = vmatpush1.xpose.msra.mxu0 %v73
    %122 = vmatprep.subr.mxu0 0.0
    %123 = vmatpush1.xpose.msra.mxu0 %v76
    %124 = vmatprep.subr.mxu0 0.0
    %125 = vmatpush1.xpose.msra.mxu0 %v79
    %126 = vmatprep.subr.mxu0 0.0
    %127 = vmatpush1.xpose.msra.mxu0 %v82
    %128 = vmatprep.subr.mxu0 0.0
    %129 = vmatpush1.xpose.msra.mxu0 %v85
    %130 = vmatprep.subr.mxu0 0.0
    %131 = vmatpush1.xpose.msra.mxu0 %v88
    %132 = vmatprep.subr.mxu0 0.0
    %133 = vmatpush1.xpose.msra.mxu0 %v91
    %134 = vmatprep.subr.mxu0 0.0
    %135 = vmatpush1.xpose.msra.mxu0 %v94
    %136 = vmatprep.subr.mxu0 0.0
    %137 = vmatpush1.xpose.msra.mxu0 %v97
    %138 = vmatprep.subr.mxu0 0.0
    %139 = vmatpush1.xpose.msra.mxu0 %v100
    %140 = vmatprep.subr.mxu0 0.0
    %141 = vmatpush1.xpose.msra.mxu0 %v103
    %142 = vmatprep.subr.mxu0 0.0
    %143 = vmatpush1.xpose.msra.mxu0 %v106
    %144 = vmatprep.subr.mxu0 0.0
    %145 = vmatpush1.xpose.msra.mxu0 %v109
    %146 = vmatprep.subr.mxu0 0.0
    %147 = vmatpush1.xpose.msra.mxu0 %v112
    %148 = vmatprep.subr.mxu0 0.0
    %149 = vmatpush1.xpose.msra.mxu0 %v115
    %150 = vmatprep.subr.mxu0 0.0
    %151 = vmatpush1.xpose.msra.mxu0 %v118
    %152 = vmatprep.subr.mxu0 0.0
    %153 = vmatpush1.xpose.msra.mxu0 0.0
    %154 = vmatprep.subr.mxu0 0.0
    %155 = vmatpush1.xpose.msra.mxu0 0.0
    %156 = vmatprep.subr.mxu0 0.0
    %157 = vmatpush1.xpose.msra.mxu0 0.0
    %158 = vmatprep.subr.mxu0 0.0
    %159 = vmatpush1.xpose.msra.mxu0 0.0
    %160 = vmatprep.subr.mxu0 0.0
    %161 = vmatpush1.xpose.msra.mxu0 0.0
    %162 = vmatprep.subr.mxu0 0.0
    %163 = vmatpush1.xpose.msra.mxu0 0.0
    %164 = vmatprep.subr.mxu0 0.0
    %165 = vmatpush1.xpose.msra.mxu0 0.0
    %166 = vmatprep.subr.mxu0 0.0
    %167 = vmatpush1.xpose.msra.mxu0 0.0
    %168 = vmatprep.subr.mxu0 0.0
    %169 = vmatpush1.xpose.msra.mxu0 0.0
    %170 = vmatprep.subr.mxu0 0.0
    %171 = vmatpush1.xpose.msra.mxu0 0.0
    %172 = vmatprep.subr.mxu0 0.0
    %173 = vmatpush1.xpose.msra.mxu0 0.0
    %174 = vmatprep.subr.mxu0 0.0
    %175 = vmatpush1.xpose.msra.mxu0 0.0
    %176 = vmatprep.subr.mxu0 0.0
    %177 = vmatpush1.xpose.msra.mxu0 0.0
    %178 = vmatprep.subr.mxu0 0.0
    %179 = vmatpush1.xpose.msra.mxu0 0.0
    %180 = vmatprep.subr.mxu0 0.0
    %181 = vmatpush1.xpose.msra.mxu0 0.0
    %182 = vmatprep.subr.mxu0 0.0
    %183 = vmatpush1.xpose.msra.mxu0 0.0
    %184 = vmatprep.mubr.f32.mxu0 0.0
    %185 = vmatmul.mubr.f32.gmra.mrb[0].mxu0 %v67
    %v186 = vpop.f32.mrb[0].mxu0
    %v187 = vadd.f32 %v58, %v186
    %v188 = vpop.f32.mrb[0].mxu0
    %189 = vmatprep.mubr.f32.mxu0 0.0
    %190 = vmatmul.mubr.f32.gmra.mrb[0].mxu0 %v70
    %v191 = vpop.f32.mrb[0].mxu0
    %v192 = vadd.f32 %v63, %v191
    %v193 = vpop.f32.mrb[0].mxu0
    %194 = vdwg.mxu0
    %v195 = vtanh.pop %v187
    %v196 = vtanh.pop %v192
    %v197 = vld [vmem:[%s3] sm:$0x3]
    %v198 = vld [vmem:[%s4] sm:$0x3]
    %200 = vset.pattern.permute.xlu0 0
    %201 = vperm.xlu0 %200, %v198
    %v202 = vpop.permute.xlu0 %201
    %vm204 = vcmask 130048
    %v206 = vsel %vm204, %v197, 0
    %208 = vmatprep.subr.mxu0 0.0
    %209 = vmatpush1.msra.mxu0 %v195
    %210 = vmatprep.subr.mxu0 0.0
    %211 = vmatpush1.msra.mxu0 %v196
    %212 = vmatprep.subr.mxu0 0.0
    %213 = vmatpush1.msra.mxu0 0.0
    %214 = vmatprep.subr.mxu0 0.0
    %215 = vmatpush1.msra.mxu0 0.0
    %216 = vmatprep.subr.mxu0 0.0
    %217 = vmatpush1.msra.mxu0 0.0
    %218 = vmatprep.subr.mxu0 0.0
    %219 = vmatpush1.msra.mxu0 0.0
    %220 = vmatprep.subr.mxu0 0.0
    %221 = vmatpush1.msra.mxu0 0.0
    %222 = vmatprep.subr.mxu0 0.0
    %223 = vmatpush1.msra.mxu0 0.0
    %224 = vmatprep.subr.mxu0 0.0
    %225 = vmatpush1.msra.mxu0 0.0
    %226 = vmatprep.subr.mxu0 0.0
    %227 = vmatpush1.msra.mxu0 0.0
    %228 = vmatprep.subr.mxu0 0.0
    %229 = vmatpush1.msra.mxu0 0.0
    %230 = vmatprep.subr.mxu0 0.0
    %231 = vmatpush1.msra.mxu0 0.0
    %232 = vmatprep.subr.mxu0 0.0
    %233 = vmatpush1.msra.mxu0 0.0
    %234 = vmatprep.subr.mxu0 0.0
    %235 = vmatpush1.msra.mxu0 0.0
    %236 = vmatprep.subr.mxu0 0.0
    %237 = vmatpush1.msra.mxu0 0.0
    %238 = vmatprep.subr.mxu0 0.0
    %239 = vmatpush1.msra.mxu0 0.0
    %240 = vmatprep.subr.mxu0 0.0
    %241 = vmatpush1.msra.mxu0 0.0
    %242 = vmatprep.subr.mxu0 0.0
    %243 = vmatpush1.msra.mxu0 0.0
    %244 = vmatprep.subr.mxu0 0.0
    %245 = vmatpush1.msra.mxu0 0.0
    %246 = vmatprep.subr.mxu0 0.0
    %247 = vmatpush1.msra.mxu0 0.0
    %248 = vmatprep.subr.mxu0 0.0
    %249 = vmatpush1.msra.mxu0 0.0
    %250 = vmatprep.subr.mxu0 0.0
    %251 = vmatpush1.msra.mxu0 0.0
    %252 = vmatprep.subr.mxu0 0.0
    %253 = vmatpush1.msra.mxu0 0.0
    %254 = vmatprep.subr.mxu0 0.0
    %255 = vmatpush1.msra.mxu0 0.0
    %256 = vmatprep.subr.mxu0 0.0
    %257 = vmatpush1.msra.mxu0 0.0
    %258 = vmatprep.subr.mxu0 0.0
    %259 = vmatpush1.msra.mxu0 0.0
    %260 = vmatprep.subr.mxu0 0.0
    %261 = vmatpush1.msra.mxu0 0.0
    %262 = vmatprep.subr.mxu0 0.0
    %263 = vmatpush1.msra.mxu0 0.0
    %264 = vmatprep.subr.mxu0 0.0
    %265 = vmatpush1.msra.mxu0 0.0
    %266 = vmatprep.subr.mxu0 0.0
    %267 = vmatpush1.msra.mxu0 0.0
    %268 = vmatprep.subr.mxu0 0.0
    %269 = vmatpush1.msra.mxu0 0.0
    %270 = vmatprep.subr.mxu0 0.0
    %271 = vmatpush1.msra.mxu0 0.0
    %272 = vmatprep.mubr.f32.mxu0 0.0
    %273 = vmatmul.mubr.f32.gmra.mrb[0].mxu0 %v206
    %v274 = vpop.f32.mrb[0].mxu0
    %v275 = vadd.f32 %v202, %v274
    %v276 = vpop.f32.mrb[0].mxu0
    %277 = vdwg.mxu0
    %278 = vst [vmem:[#allocation5] sm:$0x3] %v275
    // Predicated region
    $region26: #{tpu_custom_call.1} parent=1 // pred_check
      _
    $region27: #{tpu_custom_call.1} parent=1 // pred_check_branch
      %280 = sbr.rel (0) target = $region29
    $region28: #{tpu_custom_call.1} parent=1 // pred_region
      %s282 = ssub.s32 32, 32
      %283 = vsyncadd [#allocation4], %s282
      %s285 = sshll.u32 [#allocation5], 4
      %s286 = int_to_ptr.vmem [resolvable:$true] %s285
      %288 = dma.vmem_to_hbm [thread:$0]  %s286, 32, %s5, [#allocation4]
    $region29: #{tpu_custom_call.1} parent=1 // pred_fallthru
      _
    // Predicated region
    $region30: #{tpu_custom_call.1} parent=1 // pred_check
      _
    $region31: #{tpu_custom_call.1} parent=1 // pred_check_branch
      %290 = sbr.rel (0) target = $region33
    $region32: #{tpu_custom_call.1} parent=1 // pred_region
      %291 = dma.done [#allocation4], 32
    $region33: #{tpu_custom_call.1} parent=1 // pred_fallthru
      _
    %292 = vsyncpa [#allocation3], 1
    %293 = vsyncpa [#allocation4], 1

</llo_original>
